<compile_context>
chip_gen: v6e
topology: v6e:2x2x1
jax: 0.10.0
libtpu: 0.0.40
codegen_flags: <defaults>
</compile_context>

<pallas_src>
import functools
import math

import jax
import jax.numpy as jnp
from jax.experimental import pallas as pl
from jax.experimental.pallas import tpu as pltpu

IN_FEATURES = 10    # ModelShard(input_size=10, output_size=5)
OUT_FEATURES = 5
SUBLANE = 8         # f32 sublane tile
LANE = 128          # lane tile


def _round_up(n, m):
    return ((n + m - 1) // m) * m


def prepare_params(w_pt, b):
    """One-time parameter prep (module init), NOT per forward call.

    w_pt : (out_features, in_features) f32 — PyTorch nn.Linear weight layout.
    b    : (out_features,)             f32
    Returns:
      w_prep : (n_pad, in_features) f32, rows [out_features:] are zero (n_pad = round_up(out, 8))
      b_prep : (n_pad, 1) f32
    Keeping the weight in (out, in) layout lets the kernel produce the transposed
    output y^T = W @ x^T directly on the MXU, with batch on the 128-lane axis.
    """
    n_out, k = w_pt.shape
    n_pad = _round_up(n_out, SUBLANE)
    w_prep = jnp.zeros((n_pad, k), jnp.float32).at[:n_out, :].set(w_pt.astype(jnp.float32))
    b_prep = jnp.zeros((n_pad, 1), jnp.float32).at[:n_out, 0].set(b.astype(jnp.float32))
    return w_prep, b_prep


def _linear_t_kernel(x_ref, w_ref, b_ref, o_ref):
    """One batch tile of y^T: contract K of W (n_pad, K) with K of x (TB, K) -> (n_pad, TB).

    MXU matmul with f32 accumulation (NT contraction, same form as the reference
    flash-attention 'bqd,bkd->bqk' einsum); bias broadcast over the lane (batch) axis.
    TB is a multiple of 128 on the grid path, so the store is unmasked full-lane vst.
    """
    acc = jax.lax.dot_general(
        w_ref[...], x_ref[...],
        dimension_numbers=(((1,), (1,)), ((), ())),   # contract K with K
        preferred_element_type=jnp.float32,
    )
    o_ref[...] = (acc + b_ref[...]).astype(o_ref.dtype)


def _forward_padded_t(x, w_prep, b_prep, *, max_batch_tile, grid_min_batch):
    """Raw kernel output: padded, transposed (n_pad, B) f32 slab."""
    B, K = x.shape
    n_pad = w_prep.shape[0]

    if B < grid_min_batch:
        # Single-tile problem: no grid -> no pipeline prologue/epilogue; everything
        # lives in VMEM for the duration of the call.
        return pl.pallas_call(
            _linear_t_kernel,
            out_shape=jax.ShapeDtypeStruct((n_pad, B), jnp.float32),
            in_specs=[
                pl.BlockSpec(memory_space=pltpu.MemorySpace.VMEM),
                pl.BlockSpec(memory_space=pltpu.MemorySpace.VMEM),
                pl.BlockSpec(memory_space=pltpu.MemorySpace.VMEM),
            ],
            out_specs=pl.BlockSpec(memory_space=pltpu.MemorySpace.VMEM),
        )(x, w_prep, b_prep)

    # Grid path: tile only the batch axis. Tile sizing guarantees >=2 "parallel"
    # grid steps (so both v7x TensorCores get work) while capping the tile (default
    # 4096) to keep per-step DMAs large on single-TC v5e/v6e. No jnp.pad of x:
    # Pallas DMAs only the valid sub-rectangle of a partial last block, and the
    # corresponding out-of-range output columns are never written back.
    max_tile = max(LANE, (max_batch_tile // LANE) * LANE)
    tb = min(max_tile, _round_up(pl.cdiv(B, 2), LANE))
    num_tiles = pl.cdiv(B, tb)

    return pl.pallas_call(
        _linear_t_kernel,
        out_shape=jax.ShapeDtypeStruct((n_pad, B), jnp.float32),
        grid=(num_tiles,),
        in_specs=[
            pl.BlockSpec((tb, K), lambda i: (i, 0)),       # batch tile of x
            pl.BlockSpec((n_pad, K), lambda i: (0, 0)),    # W resident across steps
            pl.BlockSpec((n_pad, 1), lambda i: (0, 0)),    # bias resident across steps
        ],
        out_specs=pl.BlockSpec((n_pad, tb), lambda i: (0, i)),
        compiler_params=pltpu.CompilerParams(
            dimension_semantics=("parallel",)),
    )(x, w_prep, b_prep)


@functools.partial(
    jax.jit, static_argnames=("out_features", "max_batch_tile", "grid_min_batch"))
def model_shard_forward(x, w_prep, b_prep, *, out_features,
                        max_batch_tile=4096, grid_min_batch=1024):
    """Pallas equivalent of ModelShard.forward: returns (B, out_features) f32."""
    out_t = _forward_padded_t(x, w_prep, b_prep,
                              max_batch_tile=max_batch_tile,
                              grid_min_batch=grid_min_batch)
    # Consumers that can read the transposed (n_pad, B) slab directly should use
    # _forward_padded_t and skip this; the slice+transpose here touches only
    # ~40 bytes/row and runs fused inside the same jitted program.
    return out_t[:out_features, :].T


if __name__ == "__main__":
    key = jax.random.PRNGKey(0)
    kx, kw, kb, kx2, kx3 = jax.random.split(key, 5)

    # Deterministic parameter init (mimics nn.Linear uniform(-1/sqrt(in), 1/sqrt(in))),
    # padded ONCE at init time.
    bound = 1.0 / math.sqrt(IN_FEATURES)
    w_pt = jax.random.uniform(kw, (OUT_FEATURES, IN_FEATURES),
                              minval=-bound, maxval=bound, dtype=jnp.float32)
    b = jax.random.uniform(kb, (OUT_FEATURES,),
                           minval=-bound, maxval=bound, dtype=jnp.float32)
    w_prep, b_prep = prepare_params(w_pt, b)

    # 1) Small batch (matches the original toy module) -> no-grid single-tile path.
    B = 8
    x = jax.random.normal(kx, (B, IN_FEATURES), dtype=jnp.float32)
    out = jax.block_until_ready(
        model_shard_forward(x, w_prep, b_prep, out_features=OUT_FEATURES))
    ref = x @ w_pt.T + b[None, :]
    assert out.shape == (B, OUT_FEATURES)
    assert jnp.allclose(out, ref, atol=1e-5, rtol=1e-5)

    # 2) Large batch, divides evenly -> 2 "parallel" grid steps (both v7x TCs busy).
    B2 = 4096
    x2 = jax.random.normal(kx2, (B2, IN_FEATURES), dtype=jnp.float32)
    out2 = jax.block_until_ready(
        model_shard_forward(x2, w_prep, b_prep, out_features=OUT_FEATURES))
    ref2 = x2 @ w_pt.T + b[None, :]
    assert out2.shape == (B2, OUT_FEATURES)
    assert jnp.allclose(out2, ref2, atol=1e-5, rtol=1e-5)

    # 3) Ragged batch -> partial last block handled by Pallas (no jnp.pad copy of x).
    B3 = 2500
    x3 = jax.random.normal(kx3, (B3, IN_FEATURES), dtype=jnp.float32)
    out3 = jax.block_until_ready(
        model_shard_forward(x3, w_prep, b_prep, out_features=OUT_FEATURES,
                            max_batch_tile=1024))
    ref3 = x3 @ w_pt.T + b[None, :]
    assert out3.shape == (B3, OUT_FEATURES)
    assert jnp.allclose(out3, ref3, atol=1e-5, rtol=1e-5)

    print("KERNEL_OK")
</pallas_src>

<mosaic_0001>
module attributes {stable_mosaic.version = 11 : i64} {
  func.func @_linear_t_kernel(%arg0: memref<8x10xf32, #tpu.memory_space<vmem>>, %arg1: memref<8x10xf32, #tpu.memory_space<vmem>>, %arg2: memref<8x1xf32, #tpu.memory_space<vmem>>, %arg3: memref<8x8xf32, #tpu.memory_space<vmem>>) attributes {dimension_semantics = [], scalar_prefetch = 0 : i64, scratch_operands = 0 : i64, tpu.core_type = #tpu.core_type<tc>} {
    %c0 = arith.constant 0 : index
    %c0_0 = arith.constant 0 : index
    %0 = vector.load %arg1[%c0, %c0_0] : memref<8x10xf32, #tpu.memory_space<vmem>>, vector<8x10xf32>
    %c0_1 = arith.constant 0 : index
    %c0_2 = arith.constant 0 : index
    %1 = vector.load %arg0[%c0_1, %c0_2] : memref<8x10xf32, #tpu.memory_space<vmem>>, vector<8x10xf32>
    %cst = arith.constant dense<0.000000e+00> : vector<8x8xf32>
    %2 = tpu.matmul %0, %1, %cst {dimension_numbers = #tpu.dot_dimension_numbers<[1], [1], [0], [0], [0, 0, 1, 0], [], []>} : vector<8x10xf32>, vector<8x10xf32>, vector<8x8xf32> -> vector<8x8xf32>
    %c0_3 = arith.constant 0 : index
    %c0_4 = arith.constant 0 : index
    %3 = vector.load %arg2[%c0_3, %c0_4] : memref<8x1xf32, #tpu.memory_space<vmem>>, vector<8x1xf32>
    %4 = vector.broadcast %3 : vector<8x1xf32> to vector<8x8xf32>
    %5 = arith.addf %2, %4 : vector<8x8xf32>
    %c0_5 = arith.constant 0 : index
    %c0_6 = arith.constant 0 : index
    %6 = vector.load %arg3[%c0_5, %c0_6] : memref<8x8xf32, #tpu.memory_space<vmem>>, vector<8x8xf32>
    tpu.vector_store %arg3[%c0_5, %c0_6], %5 {strides = array<i32>} : memref<8x8xf32, #tpu.memory_space<vmem>>, vector<8x8xf32>,
    return
  }
}

</mosaic_0001>

<llo_original>
// kernel: model_shard_forward.1
$region0: #{model_shard_forward.1}
  #allocation0 [shape = 'u32[]', space=smem, size = 0x4, offset = 0x4, fixed_abs, tag = 'smem constant byte address 0x4 - core index']
  #allocation1 [shape = 'u32[144,128]{1,0:T(1,128)}', space=vmem, size = 0x12000, scoped, tag = 'internal scratch']
  %s0 = inlined_call_operand.vmem [shape: f32[8,10], index: 0, kind: input, shape index: {}]
  %s1 = inlined_call_operand.hbm [shape: f32[8,10], index: 1, kind: input, shape index: {}]
  %s2 = inlined_call_operand.vmem [shape: f32[8,1], index: 2, kind: input, shape index: {}]
  %s3 = inlined_call_operand.vmem [shape: f32[8,8], index: 3, kind: output, shape index: {}]
  %s4 = sld [smem:[#allocation0]]
  $region26: #{model_shard_forward.1} parent=0
    _
  %s6 = ssub.s32 1, %s4
  %s7 = scalar_select 0, %s6, %s4
  $region1: #{model_shard_forward.1} parent=0
    #allocation2 [shape = 'u8[4096]{0}', space=vmem, size = 0x1000, scoped, tag = 'input window, operand 1, single buffered']
    #allocation3 [shape = 's32[1]{0}', space=sflag, size = 0x4, scoped, tag = 'scoped memory for model_shard_forward.1']
    %8 = vsyncpa [#allocation3], 0
    // Predicated region
    $region2: #{model_shard_forward.1} parent=1 // pred_check
      _
    $region3: #{model_shard_forward.1} parent=1 // pred_check_branch
      %10 = sbr.rel (0) target = $region5
    $region4: #{model_shard_forward.1} parent=1 // pred_region
      _
    $region5: #{model_shard_forward.1} parent=1 // pred_fallthru
      _
    // Predicated region
    $region6: #{model_shard_forward.1} parent=1 // pred_check
      _
    $region7: #{model_shard_forward.1} parent=1 // pred_check_branch
      %12 = sbr.rel (0) target = $region9
    $region8: #{model_shard_forward.1} parent=1 // pred_region
      %s14 = ssub.s32 128, 128
      %15 = vsyncadd [#allocation3], %s14
      %s17 = sshll.u32 [#allocation2], 4
      %s18 = int_to_ptr.vmem [resolvable:$true] %s17
      %20 = dma.hbm_to_vmem [thread:$0]  %s1, 128, %s18, [#allocation3]
    $region9: #{model_shard_forward.1} parent=1 // pred_fallthru
      _
    // Predicated region
    $region10: #{model_shard_forward.1} parent=1 // pred_check
      _
    $region11: #{model_shard_forward.1} parent=1 // pred_check_branch
      %22 = sbr.rel (0) target = $region13
    $region12: #{model_shard_forward.1} parent=1 // pred_region
      _
    $region13: #{model_shard_forward.1} parent=1 // pred_fallthru
      _
    // Predicated region
    $region14: #{model_shard_forward.1} parent=1 // pred_check
      _
    $region15: #{model_shard_forward.1} parent=1 // pred_check_branch
      %24 = sbr.rel (0) target = $region17
    $region16: #{model_shard_forward.1} parent=1 // pred_region
      %25 = dma.done [#allocation3], 128
    $region17: #{model_shard_forward.1} parent=1 // pred_fallthru
      _
    %v26 = vld [vmem:[#allocation2] sm:$0xff]
    %v27 = vld [vmem:[%s0] sm:$0xff]
    %v28 = vld [vmem:[%s2] sm:$0xff]
    %30 = vset.pattern.permute.xlu0 0
    %31 = vperm.xlu0 %30, %v28
    %v32 = vpop.permute.xlu0 %31
    %vm34 = vcmask 80896
    %v36 = vsel %vm34, %v26, 0
    %v39 = vsel %vm34, %v27, 0
    %41 = vmatprep.subr.mxu0 0.0
    %42 = vmatpush1.xpose.msra.mxu0 0.0
    %43 = vmatprep.subr.mxu0 0.0
    %44 = vmatpush1.xpose.msra.mxu0 0.0
    %45 = vmatprep.subr.mxu0 0.0
    %46 = vmatpush1.xpose.msra.mxu0 0.0
    %47 = vmatprep.subr.mxu0 0.0
    %48 = vmatpush1.xpose.msra.mxu0 0.0
    %49 = vmatprep.subr.mxu0 0.0
    %50 = vmatpush1.xpose.msra.mxu0 0.0
    %51 = vmatprep.subr.mxu0 0.0
    %52 = vmatpush1.xpose.msra.mxu0 0.0
    %53 = vmatprep.subr.mxu0 0.0
    %54 = vmatpush1.xpose.msra.mxu0 0.0
    %55 = vmatprep.subr.mxu0 0.0
    %56 = vmatpush1.xpose.msra.mxu0 0.0
    %57 = vmatprep.subr.mxu0 0.0
    %58 = vmatpush1.xpose.msra.mxu0 0.0
    %59 = vmatprep.subr.mxu0 0.0
    %60 = vmatpush1.xpose.msra.mxu0 0.0
    %61 = vmatprep.subr.mxu0 0.0
    %62 = vmatpush1.xpose.msra.mxu0 0.0
    %63 = vmatprep.subr.mxu0 0.0
    %64 = vmatpush1.xpose.msra.mxu0 0.0
    %65 = vmatprep.subr.mxu0 0.0
    %66 = vmatpush1.xpose.msra.mxu0 0.0
    %67 = vmatprep.subr.mxu0 0.0
    %68 = vmatpush1.xpose.msra.mxu0 0.0
    %69 = vmatprep.subr.mxu0 0.0
    %70 = vmatpush1.xpose.msra.mxu0 0.0
    %71 = vmatprep.subr.mxu0 0.0
    %72 = vmatpush1.xpose.msra.mxu0 %v39
    %73 = vmatprep.subr.mxu0 0.0
    %74 = vmatpush2.xpose.msra.mxu0 0.0
    %75 = vmatprep.subr.mxu0 0.0
    %76 = vmatpush2.xpose.msra.mxu0 0.0
    %77 = vmatprep.subr.mxu0 0.0
    %78 = vmatpush2.xpose.msra.mxu0 0.0
    %79 = vmatprep.subr.mxu0 0.0
    %80 = vmatpush2.xpose.msra.mxu0 0.0
    %81 = vmatprep.subr.mxu0 0.0
    %82 = vmatpush2.xpose.msra.mxu0 0.0
    %83 = vmatprep.subr.mxu0 0.0
    %84 = vmatpush2.xpose.msra.mxu0 0.0
    %85 = vmatprep.subr.mxu0 0.0
    %86 = vmatpush2.xpose.msra.mxu0 0.0
    %87 = vmatprep.subr.mxu0 0.0
    %88 = vmatpush2.xpose.msra.mxu0 0.0
    %89 = vmatprep.subr.mxu0 0.0
    %90 = vmatpush2.xpose.msra.mxu0 0.0
    %91 = vmatprep.subr.mxu0 0.0
    %92 = vmatpush2.xpose.msra.mxu0 0.0
    %93 = vmatprep.subr.mxu0 0.0
    %94 = vmatpush2.xpose.msra.mxu0 0.0
    %95 = vmatprep.subr.mxu0 0.0
    %96 = vmatpush2.xpose.msra.mxu0 0.0
    %97 = vmatprep.subr.mxu0 0.0
    %98 = vmatpush2.xpose.msra.mxu0 0.0
    %99 = vmatprep.subr.mxu0 0.0
    %100 = vmatpush2.xpose.msra.mxu0 0.0
    %101 = vmatprep.subr.mxu0 0.0
    %102 = vmatpush2.xpose.msra.mxu0 0.0
    %103 = vmatprep.subr.mxu0 0.0
    %104 = vmatpush2.xpose.msra.mxu0 0.0
    %105 = vmatprep.mubr.f32.mxu0 0.0
    %106 = vmatmul.mubr.f32.gmra.mxu0 %v36
    %v107 = vpop.f32.mrf.mxu0
    %v108 = vadd.f32 %v32, %v107
    %v109 = vpop.f32.mrf.mxu0
    %110 = vdwg.mxu0
    %vm111 = vcmask 64512
    %112 = vst.msk [vmem:[%s3] sm:$0xff] %vm111, %v108
    // Predicated region
    $region18: #{model_shard_forward.1} parent=1 // pred_check
      _
    $region19: #{model_shard_forward.1} parent=1 // pred_check_branch
      %114 = sbr.rel (0) target = $region21
    $region20: #{model_shard_forward.1} parent=1 // pred_region
      _
    $region21: #{model_shard_forward.1} parent=1 // pred_fallthru
      _
    // Predicated region
    $region22: #{model_shard_forward.1} parent=1 // pred_check
      _
    $region23: #{model_shard_forward.1} parent=1 // pred_check_branch
      %116 = sbr.rel (0) target = $region25
    $region24: #{model_shard_forward.1} parent=1 // pred_region
      _
    $region25: #{model_shard_forward.1} parent=1 // pred_fallthru
      _
    %117 = vsyncpa [#allocation3], 1

</llo_original>
